<compile_context>
chip_gen: v7x
topology: tpu7x:2x2x1
jax: 0.10.0
libtpu: 0.0.40
codegen_flags: <defaults>
</compile_context>

<pallas_src>
import functools

import jax
import jax.numpy as jnp
from jax.experimental import pallas as pl
from jax.experimental.pallas import tpu as pltpu


def _rowwise_ce_keepdims(x_f32, t_i32):
    """Per-row cross entropy: (TM, V) f32 + (TM, 1) i32 -> (TM, 1) f32."""
    V = x_f32.shape[-1]
    classes = jax.lax.broadcasted_iota(jnp.int32, (1, V), 1)        # lane iota
    hit = classes == t_i32                                          # (TM, V)
    # pass 1 over the tile: row max + target logit (cmp + select, no one-hot mul)
    m = jnp.max(x_f32, axis=-1, keepdims=True)                      # (TM, 1)
    picked = jnp.sum(jnp.where(hit, x_f32, 0.0), axis=-1, keepdims=True)
    # pass 2: shifted sum-exp
    s = jnp.sum(jnp.exp(x_f32 - m), axis=-1, keepdims=True)         # (TM, 1)
    return m + jnp.log(s) - picked                                  # (TM, 1)


def _seq_ce_total_kernel(logits_ref, targets_ref, acc_ref, *, num_rows):
    """per_instance=False: accumulate total CE over valid rows into (1,1)."""
    i = pl.program_id(0)

    @pl.when(i == 0)
    def _init():
        acc_ref[...] = jnp.zeros_like(acc_ref)

    x = logits_ref[...].astype(jnp.float32)      # (TM, V), cast on the VMEM tile
    t = targets_ref[...]                          # (TM, 1) int32
    ce = _rowwise_ce_keepdims(x, t)               # (TM, 1)

    # Mask rows that are padding (R was padded up to a multiple of TM).
    tm = x.shape[0]
    rid = i * tm + jax.lax.broadcasted_iota(jnp.int32, (tm, 1), 0)
    ce = jnp.where(rid < num_rows, ce, 0.0)

    acc_ref[...] += jnp.sum(ce)


def _seq_ce_rows_kernel(logits_ref, targets_ref, out_ref):
    """per_instance=True: lane-dense per-row CE; out block is (1, 1, TM)."""
    x = logits_ref[...].astype(jnp.float32)       # (TM, V)
    t = targets_ref[...]                           # (TM, 1) int32
    tm, V = x.shape
    classes = jax.lax.broadcasted_iota(jnp.int32, (1, V), 1)
    hit = classes == t                             # (TM, V)
    # pass 1: row max + target logit
    m = jnp.max(x, axis=-1)                        # (TM,)
    picked = jnp.sum(jnp.where(hit, x, 0.0), axis=-1)
    # pass 2: shifted sum-exp
    s = jnp.sum(jnp.exp(x - m[:, None]), axis=-1)  # (TM,)
    ce = m + jnp.log(s) - picked                   # (TM,) lane-major
    out_ref[...] = ce.reshape(1, 1, tm)            # unmasked, lane-dense store


def sequence_loss(embeddings, targets, per_instance=False):
    """Pallas implementation of SequenceLoss.forward (cross-entropy loss)."""
    B, T, V = embeddings.shape
    R = B * T
    itemsize = jnp.dtype(embeddings.dtype).itemsize

    # Row-tile sizing: TM = G*128 rows so one logits block is ~1 MiB — big
    # enough to amortize per-grid-step overhead (~85% of HBM roofline per the
    # measured tile sweep), small enough that 2x double-buffered inputs plus
    # in-kernel f32 temporaries fit v5e's 16 MiB default scoped VMEM.
    target_block_bytes = 1 << 20
    bytes_per_128rows = 128 * V * itemsize
    g = max(1, min(target_block_bytes // bytes_per_128rows, pl.cdiv(R, 128)))
    tm = int(g) * 128
    r_pad = pl.cdiv(R, tm) * tm
    num_tiles = r_pad // tm

    logits = embeddings.reshape(R, V)               # free reshape, native dtype
    tgt = targets.reshape(R, 1).astype(jnp.int32)
    if r_pad != R:
        logits = jnp.pad(logits, ((0, r_pad - R), (0, 0)))
        tgt = jnp.pad(tgt, ((0, r_pad - R), (0, 0)))

    in_specs = [
        pl.BlockSpec((tm, V), lambda i: (i, 0)),    # streamed logits tiles
        pl.BlockSpec((tm, 1), lambda i: (i, 0)),    # tiny int32 targets tile
    ]

    if per_instance:
        per_row = pl.pallas_call(
            _seq_ce_rows_kernel,
            out_shape=jax.ShapeDtypeStruct((num_tiles, 1, tm), jnp.float32),
            grid=(num_tiles,),
            in_specs=in_specs,
            out_specs=pl.BlockSpec((1, 1, tm), lambda i: (i, 0, 0)),
            compiler_params=pltpu.CompilerParams(
                dimension_semantics=("parallel",)),   # megacore on v7x
        )(logits, tgt)
        # CrossEntropyLoss(reduction='none') summed over steps -> shape (B,)
        ce = per_row.reshape(r_pad)[:R].reshape(B, T)
        return ce.sum(axis=1)

    total = pl.pallas_call(
        functools.partial(_seq_ce_total_kernel, num_rows=R),
        out_shape=jax.ShapeDtypeStruct((1, 1), jnp.float32),
        grid=(num_tiles,),
        in_specs=in_specs,
        out_specs=pl.BlockSpec((1, 1), lambda i: (0, 0)),   # resident accumulator
        compiler_params=pltpu.CompilerParams(
            dimension_semantics=("arbitrary",)),   # reduction into one output block
    )(logits, tgt)
    # sum_t mean_b CE  ==  total CE / B  (CrossEntropyLoss default 'mean')
    return total[0, 0] / B


def _reference(embeddings, targets, per_instance=False):
    logp = jax.nn.log_softmax(embeddings.astype(jnp.float32), axis=-1)   # (B,T,V)
    ce = -jnp.take_along_axis(logp, targets[..., None].astype(jnp.int32),
                              axis=-1)[..., 0]                           # (B,T)
    if per_instance:
        return ce.sum(axis=1)
    return ce.mean(axis=0).sum()


if __name__ == "__main__":
    B, T, V = 2, 8, 32  # batch, sequence length, num classes
    key = jax.random.PRNGKey(0)
    k_emb, k_tgt = jax.random.split(key)
    embeddings = jax.random.normal(k_emb, (B, T, V), dtype=jnp.float32)
    targets = jax.random.randint(k_tgt, (B, T), 0, V, dtype=jnp.int32)

    # scalar (per_instance=False) path — in-kernel total accumulation
    loss_scalar = jax.block_until_ready(sequence_loss(embeddings, targets, False))
    ref_scalar = _reference(embeddings, targets, False)
    assert jnp.allclose(loss_scalar, ref_scalar, atol=1e-4, rtol=1e-4)

    # per-instance path — lane-dense per-row CE + tiny JAX sum over steps
    loss_pi = jax.block_until_ready(sequence_loss(embeddings, targets, True))
    ref_pi = _reference(embeddings, targets, True)
    assert loss_pi.shape == (B,)
    assert jnp.allclose(loss_pi, ref_pi, atol=1e-4, rtol=1e-4)

    # bf16 streaming path: no wrapper up-cast, cast happens on the VMEM tile
    emb_bf16 = embeddings.astype(jnp.bfloat16)
    loss_bf16 = jax.block_until_ready(sequence_loss(emb_bf16, targets, False))
    ref_bf16 = _reference(emb_bf16, targets, False)
    assert jnp.allclose(loss_bf16, ref_bf16, atol=1e-3, rtol=1e-3)

    print("KERNEL_OK")
</pallas_src>

<mosaic_0001>
module attributes {stable_mosaic.version = 11 : i64} {
  func.func @_seq_ce_total_kernel(%arg0: i32, %arg1: memref<128x32xf32, #tpu.memory_space<vmem>>, %arg2: memref<128x1xi32, #tpu.memory_space<vmem>>, %arg3: memref<1x1xf32, #tpu.memory_space<vmem>>) attributes {dimension_semantics = [#tpu.dimension_semantics<arbitrary>], iteration_bounds = array<i64: 1>, scalar_prefetch = 0 : i64, scratch_operands = 0 : i64, tpu.core_type = #tpu.core_type<tc>, window_params = [{transform_indices = @transform_0, window_bounds = array<i64: 128, 32>}, {transform_indices = @transform_1, window_bounds = array<i64: 128, 1>}, {pipeline_mode = #tpu.pipeline_mode<synchronous>, transform_indices = @transform_2, window_bounds = array<i64: 1, 1>}]} {
    %c0_i32 = arith.constant 0 : i32
    %0 = arith.cmpi eq, %arg0, %c0_i32 : i32
    %1 = arith.extui %0 : i1 to i32
    %c0_i32_0 = arith.constant 0 : i32
    %2 = arith.cmpi ne, %1, %c0_i32_0 : i32
    scf.if %2 {
      %cst_13 = arith.constant 0.000000e+00 : f32
      %39 = vector.broadcast %cst_13 : f32 to vector<1x1xf32>
      %c0_14 = arith.constant 0 : index
      %c0_15 = arith.constant 0 : index
      %40 = vector.load %arg3[%c0_14, %c0_15] : memref<1x1xf32, #tpu.memory_space<vmem>>, vector<1x1xf32>
      tpu.vector_store %arg3[%c0_14, %c0_15], %39 {strides = array<i32>} : memref<1x1xf32, #tpu.memory_space<vmem>>, vector<1x1xf32>,
    } else {
    }
    %c0 = arith.constant 0 : index
    %c0_1 = arith.constant 0 : index
    %3 = vector.load %arg1[%c0, %c0_1] : memref<128x32xf32, #tpu.memory_space<vmem>>, vector<128x32xf32>
    %c0_2 = arith.constant 0 : index
    %c0_3 = arith.constant 0 : index
    %4 = vector.load %arg2[%c0_2, %c0_3] : memref<128x1xi32, #tpu.memory_space<vmem>>, vector<128x1xi32>
    %5 = tpu.iota {dimensions = array<i32: 1>} : vector<1x32xi32>
    %6 = vector.broadcast %5 : vector<1x32xi32> to vector<128x32xi32>
    %7 = vector.broadcast %4 : vector<128x1xi32> to vector<128x32xi32>
    %8 = arith.cmpi eq, %6, %7 : vector<128x32xi32>
    %cst = arith.constant dense<0xFF800000> : vector<128xf32>
    %9 = vector.multi_reduction <maximumf>, %3, %cst [1] : vector<128x32xf32> to vector<128xf32>
    %10 = vector.shape_cast %9 : vector<128xf32> to vector<128x1xf32>
    %cst_4 = arith.constant 0.000000e+00 : f32
    %11 = vector.broadcast %cst_4 : f32 to vector<128x32xf32>
    %12 = arith.select %8, %3, %11 : vector<128x32xi1>, vector<128x32xf32>
    %cst_5 = arith.constant dense<0.000000e+00> : vector<128xf32>
    %13 = vector.multi_reduction <add>, %12, %cst_5 [1] : vector<128x32xf32> to vector<128xf32>
    %14 = vector.shape_cast %13 : vector<128xf32> to vector<128x1xf32>
    %15 = vector.broadcast %10 : vector<128x1xf32> to vector<128x32xf32>
    %16 = arith.subf %3, %15 : vector<128x32xf32>
    %17 = math.exp %16 : vector<128x32xf32>
    %cst_6 = arith.constant dense<0.000000e+00> : vector<128xf32>
    %18 = vector.multi_reduction <add>, %17, %cst_6 [1] : vector<128x32xf32> to vector<128xf32>
    %19 = vector.shape_cast %18 : vector<128xf32> to vector<128x1xf32>
    %20 = math.log %19 : vector<128x1xf32>
    %21 = arith.addf %10, %20 : vector<128x1xf32>
    %22 = arith.subf %21, %14 : vector<128x1xf32>
    %c128_i32 = arith.constant 128 : i32
    %23 = arith.muli %arg0, %c128_i32 : i32
    %24 = tpu.iota {dimensions = array<i32: 0>} : vector<128x1xi32>
    %25 = vector.broadcast %23 : i32 to vector<128x1xi32>
    %26 = arith.addi %25, %24 : vector<128x1xi32>
    %c16_i32 = arith.constant 16 : i32
    %27 = vector.broadcast %c16_i32 : i32 to vector<128x1xi32>
    %28 = arith.cmpi slt, %26, %27 : vector<128x1xi32>
    %cst_7 = arith.constant 0.000000e+00 : f32
    %29 = vector.broadcast %cst_7 : f32 to vector<128x1xf32>
    %30 = arith.select %28, %22, %29 : vector<128x1xi1>, vector<128x1xf32>
    %c0_8 = arith.constant 0 : index
    %c0_9 = arith.constant 0 : index
    %31 = vector.load %arg3[%c0_8, %c0_9] : memref<1x1xf32, #tpu.memory_space<vmem>>, vector<1x1xf32>
    %32 = vector.shape_cast %30 : vector<128x1xf32> to vector<1x128x1xf32>
    %cst_10 = arith.constant dense<0.000000e+00> : vector<1xf32>
    %33 = vector.multi_reduction <add>, %32, %cst_10 [1, 2] : vector<1x128x1xf32> to vector<1xf32>
    %34 = vector.shape_cast %33 : vector<1xf32> to vector<1x1x1xf32>
    %35 = vector.extract %34[0, 0, 0] : f32 from vector<1x1x1xf32>
    %36 = vector.broadcast %35 : f32 to vector<1x1xf32>
    %37 = arith.addf %31, %36 : vector<1x1xf32>
    %c0_11 = arith.constant 0 : index
    %c0_12 = arith.constant 0 : index
    %38 = vector.load %arg3[%c0_11, %c0_12] : memref<1x1xf32, #tpu.memory_space<vmem>>, vector<1x1xf32>
    tpu.vector_store %arg3[%c0_11, %c0_12], %37 {strides = array<i32>} : memref<1x1xf32, #tpu.memory_space<vmem>>, vector<1x1xf32>,
    return
  }
  func.func @transform_0(%arg0: i32) -> (i32, i32) {
    %c0_i32 = arith.constant 0 : i32
    %c0_i32_0 = arith.constant 0 : i32
    return %arg0, %c0_i32 : i32, i32
  }
  func.func @transform_1(%arg0: i32) -> (i32, i32) {
    %c0_i32 = arith.constant 0 : i32
    %c0_i32_0 = arith.constant 0 : i32
    return %arg0, %c0_i32 : i32, i32
  }
  func.func @transform_2(%arg0: i32) -> (i32, i32) {
    %c0_i32 = arith.constant 0 : i32
    %c0_i32_0 = arith.constant 0 : i32
    %c0_i32_1 = arith.constant 0 : i32
    return %c0_i32, %c0_i32_0 : i32, i32
  }
}

</mosaic_0001>

<llo_original>
// kernel: tpu_custom_call.1
$region0: #{tpu_custom_call.1}
  #allocation0 [shape = 'u32[]', space=smem, size = 0x4, offset = 0x4, fixed_abs, tag = 'smem constant byte address 0x4 - core index']
  #allocation1 [shape = 'u32[144,128]{1,0:T(1,128)}', space=vmem, size = 0x12000, scoped, tag = 'internal scratch']
  %s0 = inlined_call_operand.vmem [shape: f32[128,32], index: 0, kind: input, shape index: {}]
  %s1 = inlined_call_operand.vmem [shape: s32[128,1], index: 1, kind: input, shape index: {}]
  %s2 = inlined_call_operand.hbm [shape: f32[1,1], index: 2, kind: output, shape index: {}]
  %s3 = sld [smem:[#allocation0]]
  $region22: #{tpu_custom_call.1} parent=0
    _
  %s5 = ssub.s32 1, %s3
  %s6 = scalar_select 0, %s5, %s3
  $region1: #{tpu_custom_call.1} parent=0
    #allocation2 [shape = 'u8[512]{0}', space=vmem, size = 0x400, scoped, tag = 'output window, operand 0, single buffered']
    #allocation3 [shape = 's32[1]{0}', space=sflag, size = 0x4, scoped, tag = 'scoped memory for tpu_custom_call.1']
    %7 = vsyncpa [#allocation3], 0
    // Predicated region
    $region2: #{tpu_custom_call.1} parent=1 // pred_check
      _
    $region3: #{tpu_custom_call.1} parent=1 // pred_check_branch
      %9 = sbr.rel (0) target = $region5
    $region4: #{tpu_custom_call.1} parent=1 // pred_region
      _
    $region5: #{tpu_custom_call.1} parent=1 // pred_fallthru
      _
    // Predicated region
    $region6: #{tpu_custom_call.1} parent=1 // pred_check
      _
    $region7: #{tpu_custom_call.1} parent=1 // pred_check_branch
      %11 = sbr.rel (0) target = $region9
    $region8: #{tpu_custom_call.1} parent=1 // pred_region
      _
    $region9: #{tpu_custom_call.1} parent=1 // pred_fallthru
      _
    %p12 = scmp.eq.s32.totalorder 0, 0
    // Predicated region
    $region10: #{tpu_custom_call.1} parent=1 // pred_check
      %p13 = pneg %p12
    $region11: #{tpu_custom_call.1} parent=1 // pred_check_branch
      %15 = sbr.rel (%p13) target = $region13
    $region12: #{tpu_custom_call.1} parent=1 // pred_region
      %vm16 = vcmask 0
      %17 = vst.msk [vmem:[#allocation2] sm:$0x1] %vm16, 0.0
    $region13: #{tpu_custom_call.1} parent=1 // pred_fallthru
      _
    %v18 = vld [vmem:[%s0] sm:$0xff]
    %v19 = vld [vmem:[%s0 + $0x8] sm:$0xff]
    %v20 = vld [vmem:[%s0 + $0x10] sm:$0xff]
    %v21 = vld [vmem:[%s0 + $0x18] sm:$0xff]
    %v22 = vld [vmem:[%s0 + $0x20] sm:$0xff]
    %v23 = vld [vmem:[%s0 + $0x28] sm:$0xff]
    %v24 = vld [vmem:[%s0 + $0x30] sm:$0xff]
    %v25 = vld [vmem:[%s0 + $0x38] sm:$0xff]
    %v26 = vld [vmem:[%s0 + $0x40] sm:$0xff]
    %v27 = vld [vmem:[%s0 + $0x48] sm:$0xff]
    %v28 = vld [vmem:[%s0 + $0x50] sm:$0xff]
    %v29 = vld [vmem:[%s0 + $0x58] sm:$0xff]
    %v30 = vld [vmem:[%s0 + $0x60] sm:$0xff]
    %v31 = vld [vmem:[%s0 + $0x68] sm:$0xff]
    %v32 = vld [vmem:[%s0 + $0x70] sm:$0xff]
    %v33 = vld [vmem:[%s0 + $0x78] sm:$0xff]
    %v34 = vld [vmem:[%s1] sm:$0xff]
    %v35 = vld [vmem:[%s1 + $0x8] sm:$0xff]
    %v36 = vld [vmem:[%s1 + $0x10] sm:$0xff]
    %v37 = vld [vmem:[%s1 + $0x18] sm:$0xff]
    %v38 = vld [vmem:[%s1 + $0x20] sm:$0xff]
    %v39 = vld [vmem:[%s1 + $0x28] sm:$0xff]
    %v40 = vld [vmem:[%s1 + $0x30] sm:$0xff]
    %v41 = vld [vmem:[%s1 + $0x38] sm:$0xff]
    %v42 = vld [vmem:[%s1 + $0x40] sm:$0xff]
    %v43 = vld [vmem:[%s1 + $0x48] sm:$0xff]
    %v44 = vld [vmem:[%s1 + $0x50] sm:$0xff]
    %v45 = vld [vmem:[%s1 + $0x58] sm:$0xff]
    %v46 = vld [vmem:[%s1 + $0x60] sm:$0xff]
    %v47 = vld [vmem:[%s1 + $0x68] sm:$0xff]
    %v48 = vld [vmem:[%s1 + $0x70] sm:$0xff]
    %v49 = vld [vmem:[%s1 + $0x78] sm:$0xff]
    %v50 = vlaneseq
    %v51 = vand.u32 %v50, 127
    %52 = vset.pattern.permute.xlu0 0
    %53 = vperm.xlu0 %52, %v34
    %v54 = vpop.permute.xlu0 %53
    %55 = vset.pattern.permute.xlu0 0
    %56 = vperm.xlu0 %55, %v35
    %v57 = vpop.permute.xlu0 %56
    %58 = vset.pattern.permute.xlu0 0
    %59 = vperm.xlu0 %58, %v36
    %v60 = vpop.permute.xlu0 %59
    %61 = vset.pattern.permute.xlu0 0
    %62 = vperm.xlu0 %61, %v37
    %v63 = vpop.permute.xlu0 %62
    %64 = vset.pattern.permute.xlu0 0
    %65 = vperm.xlu0 %64, %v38
    %v66 = vpop.permute.xlu0 %65
    %67 = vset.pattern.permute.xlu0 0
    %68 = vperm.xlu0 %67, %v39
    %v69 = vpop.permute.xlu0 %68
    %70 = vset.pattern.permute.xlu0 0
    %71 = vperm.xlu0 %70, %v40
    %v72 = vpop.permute.xlu0 %71
    %73 = vset.pattern.permute.xlu0 0
    %74 = vperm.xlu0 %73, %v41
    %v75 = vpop.permute.xlu0 %74
    %76 = vset.pattern.permute.xlu0 0
    %77 = vperm.xlu0 %76, %v42
    %v78 = vpop.permute.xlu0 %77
    %79 = vset.pattern.permute.xlu0 0
    %80 = vperm.xlu0 %79, %v43
    %v81 = vpop.permute.xlu0 %80
    %82 = vset.pattern.permute.xlu0 0
    %83 = vperm.xlu0 %82, %v44
    %v84 = vpop.permute.xlu0 %83
    %85 = vset.pattern.permute.xlu0 0
    %86 = vperm.xlu0 %85, %v45
    %v87 = vpop.permute.xlu0 %86
    %88 = vset.pattern.permute.xlu0 0
    %89 = vperm.xlu0 %88, %v46
    %v90 = vpop.permute.xlu0 %89
    %91 = vset.pattern.permute.xlu0 0
    %92 = vperm.xlu0 %91, %v47
    %v93 = vpop.permute.xlu0 %92
    %94 = vset.pattern.permute.xlu0 0
    %95 = vperm.xlu0 %94, %v48
    %v96 = vpop.permute.xlu0 %95
    %97 = vset.pattern.permute.xlu0 0
    %98 = vperm.xlu0 %97, %v49
    %v99 = vpop.permute.xlu0 %98
    %vm100 = vcmp.eq.s32.totalorder %v51, %v54
    %vm101 = vcmp.eq.s32.totalorder %v51, %v57
    %vm102 = vcmp.eq.s32.totalorder %v51, %v60
    %vm103 = vcmp.eq.s32.totalorder %v51, %v63
    %vm104 = vcmp.eq.s32.totalorder %v51, %v66
    %vm105 = vcmp.eq.s32.totalorder %v51, %v69
    %vm106 = vcmp.eq.s32.totalorder %v51, %v72
    %vm107 = vcmp.eq.s32.totalorder %v51, %v75
    %vm108 = vcmp.eq.s32.totalorder %v51, %v78
    %vm109 = vcmp.eq.s32.totalorder %v51, %v81
    %vm110 = vcmp.eq.s32.totalorder %v51, %v84
    %vm111 = vcmp.eq.s32.totalorder %v51, %v87
    %vm112 = vcmp.eq.s32.totalorder %v51, %v90
    %vm113 = vcmp.eq.s32.totalorder %v51, %v93
    %vm114 = vcmp.eq.s32.totalorder %v51, %v96
    %vm115 = vcmp.eq.s32.totalorder %v51, %v99
    %vm116 = vcmask 261120
    %v117 = vsel %vm116, %v18, -inf
    %118 = vmax.xlane.f32.xlu0 %v117
    %v119 = vpop.xlane.xlu0 %118
    %v120 = vsel %vm116, %v19, -inf
    %121 = vmax.xlane.f32.xlu0 %v120
    %v122 = vpop.xlane.xlu0 %121
    %v123 = vsel %vm116, %v20, -inf
    %124 = vmax.xlane.f32.xlu0 %v123
    %v125 = vpop.xlane.xlu0 %124
    %v126 = vsel %vm116, %v21, -inf
    %127 = vmax.xlane.f32.xlu0 %v126
    %v128 = vpop.xlane.xlu0 %127
    %v129 = vsel %vm116, %v22, -inf
    %130 = vmax.xlane.f32.xlu0 %v129
    %v131 = vpop.xlane.xlu0 %130
    %v132 = vsel %vm116, %v23, -inf
    %133 = vmax.xlane.f32.xlu0 %v132
    %v134 = vpop.xlane.xlu0 %133
    %v135 = vsel %vm116, %v24, -inf
    %136 = vmax.xlane.f32.xlu0 %v135
    %v137 = vpop.xlane.xlu0 %136
    %v138 = vsel %vm116, %v25, -inf
    %139 = vmax.xlane.f32.xlu0 %v138
    %v140 = vpop.xlane.xlu0 %139
    %v141 = vsel %vm116, %v26, -inf
    %142 = vmax.xlane.f32.xlu0 %v141
    %v143 = vpop.xlane.xlu0 %142
    %v144 = vsel %vm116, %v27, -inf
    %145 = vmax.xlane.f32.xlu0 %v144
    %v146 = vpop.xlane.xlu0 %145
    %v147 = vsel %vm116, %v28, -inf
    %148 = vmax.xlane.f32.xlu0 %v147
    %v149 = vpop.xlane.xlu0 %148
    %v150 = vsel %vm116, %v29, -inf
    %151 = vmax.xlane.f32.xlu0 %v150
    %v152 = vpop.xlane.xlu0 %151
    %v153 = vsel %vm116, %v30, -inf
    %154 = vmax.xlane.f32.xlu0 %v153
    %v155 = vpop.xlane.xlu0 %154
    %v156 = vsel %vm116, %v31, -inf
    %157 = vmax.xlane.f32.xlu0 %v156
    %v158 = vpop.xlane.xlu0 %157
    %v159 = vsel %vm116, %v32, -inf
    %160 = vmax.xlane.f32.xlu0 %v159
    %v161 = vpop.xlane.xlu0 %160
    %v162 = vsel %vm116, %v33, -inf
    %163 = vmax.xlane.f32.xlu0 %v162
    %v164 = vpop.xlane.xlu0 %163
    %v165 = vsel %vm100, %v18, 0.0
    %v166 = vsel %vm101, %v19, 0.0
    %v167 = vsel %vm102, %v20, 0.0
    %v168 = vsel %vm103, %v21, 0.0
    %v169 = vsel %vm104, %v22, 0.0
    %v170 = vsel %vm105, %v23, 0.0
    %v171 = vsel %vm106, %v24, 0.0
    %v172 = vsel %vm107, %v25, 0.0
    %v173 = vsel %vm108, %v26, 0.0
    %v174 = vsel %vm109, %v27, 0.0
    %v175 = vsel %vm110, %v28, 0.0
    %v176 = vsel %vm111, %v29, 0.0
    %v177 = vsel %vm112, %v30, 0.0
    %v178 = vsel %vm113, %v31, 0.0
    %v179 = vsel %vm114, %v32, 0.0
    %v180 = vsel %vm115, %v33, 0.0
    %v181 = vsel %vm116, %v165, 0.0
    %182 = vadd.xlane.f32.xlu0 %v181
    %v183 = vpop.xlane.xlu0 %182
    %v184 = vsel %vm116, %v166, 0.0
    %185 = vadd.xlane.f32.xlu0 %v184
    %v186 = vpop.xlane.xlu0 %185
    %v187 = vsel %vm116, %v167, 0.0
    %188 = vadd.xlane.f32.xlu0 %v187
    %v189 = vpop.xlane.xlu0 %188
    %v190 = vsel %vm116, %v168, 0.0
    %191 = vadd.xlane.f32.xlu0 %v190
    %v192 = vpop.xlane.xlu0 %191
    %v193 = vsel %vm116, %v169, 0.0
    %194 = vadd.xlane.f32.xlu0 %v193
    %v195 = vpop.xlane.xlu0 %194
    %v196 = vsel %vm116, %v170, 0.0
    %197 = vadd.xlane.f32.xlu0 %v196
    %v198 = vpop.xlane.xlu0 %197
    %v199 = vsel %vm116, %v171, 0.0
    %200 = vadd.xlane.f32.xlu0 %v199
    %v201 = vpop.xlane.xlu0 %200
    %v202 = vsel %vm116, %v172, 0.0
    %203 = vadd.xlane.f32.xlu0 %v202
    %v204 = vpop.xlane.xlu0 %203
    %v205 = vsel %vm116, %v173, 0.0
    %206 = vadd.xlane.f32.xlu0 %v205
    %v207 = vpop.xlane.xlu0 %206
    %v208 = vsel %vm116, %v174, 0.0
    %209 = vadd.xlane.f32.xlu0 %v208
    %v210 = vpop.xlane.xlu0 %209
    %v211 = vsel %vm116, %v175, 0.0
    %212 = vadd.xlane.f32.xlu0 %v211
    %v213 = vpop.xlane.xlu0 %212
    %v214 = vsel %vm116, %v176, 0.0
    %215 = vadd.xlane.f32.xlu0 %v214
    %v216 = vpop.xlane.xlu0 %215
    %v217 = vsel %vm116, %v177, 0.0
    %218 = vadd.xlane.f32.xlu0 %v217
    %v219 = vpop.xlane.xlu0 %218
    %v220 = vsel %vm116, %v178, 0.0
    %221 = vadd.xlane.f32.xlu0 %v220
    %v222 = vpop.xlane.xlu0 %221
    %v223 = vsel %vm116, %v179, 0.0
    %224 = vadd.xlane.f32.xlu0 %v223
    %v225 = vpop.xlane.xlu0 %224
    %v226 = vsel %vm116, %v180, 0.0
    %227 = vadd.xlane.f32.xlu0 %v226
    %v228 = vpop.xlane.xlu0 %227
    %v229 = vsub.f32 %v18, %v119
    %v230 = vsub.f32 %v19, %v122
    %v231 = vsub.f32 %v20, %v125
    %v232 = vsub.f32 %v21, %v128
    %v233 = vsub.f32 %v22, %v131
    %v234 = vsub.f32 %v23, %v134
    %v235 = vsub.f32 %v24, %v137
    %v236 = vsub.f32 %v25, %v140
    %v237 = vsub.f32 %v26, %v143
    %v238 = vsub.f32 %v27, %v146
    %v239 = vsub.f32 %v28, %v149
    %v240 = vsub.f32 %v29, %v152
    %v241 = vsub.f32 %v30, %v155
    %v242 = vsub.f32 %v31, %v158
    %v243 = vsub.f32 %v32, %v161
    %v244 = vsub.f32 %v33, %v164
    %v245 = vmul.f32 %v229, 1.442695
    %v246 = vpow.pop %v245
    %v247 = vmul.f32 %v230, 1.442695
    %v248 = vpow.pop %v247
    %v249 = vmul.f32 %v231, 1.442695
    %v250 = vpow.pop %v249
    %v251 = vmul.f32 %v232, 1.442695
    %v252 = vpow.pop %v251
    %v253 = vmul.f32 %v233, 1.442695
    %v254 = vpow.pop %v253
    %v255 = vmul.f32 %v234, 1.442695
    %v256 = vpow.pop %v255
    %v257 = vmul.f32 %v235, 1.442695
    %v258 = vpow.pop %v257
    %v259 = vmul.f32 %v236, 1.442695
    %v260 = vpow.pop %v259
    %v261 = vmul.f32 %v237, 1.442695
    %v262 = vpow.pop %v261
    %v263 = vmul.f32 %v238, 1.442695
    %v264 = vpow.pop %v263
    %v265 = vmul.f32 %v239, 1.442695
    %v266 = vpow.pop %v265
    %v267 = vmul.f32 %v240, 1.442695
    %v268 = vpow.pop %v267
    %v269 = vmul.f32 %v241, 1.442695
    %v270 = vpow.pop %v269
    %v271 = vmul.f32 %v242, 1.442695
    %v272 = vpow.pop %v271
    %v273 = vmul.f32 %v243, 1.442695
    %v274 = vpow.pop %v273
    %v275 = vmul.f32 %v244, 1.442695
    %v276 = vpow.pop %v275
    %v277 = vsel %vm116, %v246, 0.0
    %278 = vadd.xlane.f32.xlu0 %v277
    %v279 = vpop.xlane.xlu0 %278
    %v280 = vsel %vm116, %v248, 0.0
    %281 = vadd.xlane.f32.xlu0 %v280
    %v282 = vpop.xlane.xlu0 %281
    %v283 = vsel %vm116, %v250, 0.0
    %284 = vadd.xlane.f32.xlu0 %v283
    %v285 = vpop.xlane.xlu0 %284
    %v286 = vsel %vm116, %v252, 0.0
    %287 = vadd.xlane.f32.xlu0 %v286
    %v288 = vpop.xlane.xlu0 %287
    %v289 = vsel %vm116, %v254, 0.0
    %290 = vadd.xlane.f32.xlu0 %v289
    %v291 = vpop.xlane.xlu0 %290
    %v292 = vsel %vm116, %v256, 0.0
    %293 = vadd.xlane.f32.xlu0 %v292
    %v294 = vpop.xlane.xlu0 %293
    %v295 = vsel %vm116, %v258, 0.0
    %296 = vadd.xlane.f32.xlu0 %v295
    %v297 = vpop.xlane.xlu0 %296
    %v298 = vsel %vm116, %v260, 0.0
    %299 = vadd.xlane.f32.xlu0 %v298
    %v300 = vpop.xlane.xlu0 %299
    %v301 = vsel %vm116, %v262, 0.0
    %302 = vadd.xlane.f32.xlu0 %v301
    %v303 = vpop.xlane.xlu0 %302
    %v304 = vsel %vm116, %v264, 0.0
    %305 = vadd.xlane.f32.xlu0 %v304
    %v306 = vpop.xlane.xlu0 %305
    %v307 = vsel %vm116, %v266, 0.0
    %308 = vadd.xlane.f32.xlu0 %v307
    %v309 = vpop.xlane.xlu0 %308
    %v310 = vsel %vm116, %v268, 0.0
    %311 = vadd.xlane.f32.xlu0 %v310
    %v312 = vpop.xlane.xlu0 %311
    %v313 = vsel %vm116, %v270, 0.0
    %314 = vadd.xlane.f32.xlu0 %v313
    %v315 = vpop.xlane.xlu0 %314
    %v316 = vsel %vm116, %v272, 0.0
    %317 = vadd.xlane.f32.xlu0 %v316
    %v318 = vpop.xlane.xlu0 %317
    %v319 = vsel %vm116, %v274, 0.0
    %320 = vadd.xlane.f32.xlu0 %v319
    %v321 = vpop.xlane.xlu0 %320
    %v322 = vsel %vm116, %v276, 0.0
    %323 = vadd.xlane.f32.xlu0 %v322
    %v324 = vpop.xlane.xlu0 %323
    %v325 = vlog2.pop %v279
    %v326 = vmul.f32 %v325, 0.6931472
    %v327 = vlog2.pop %v282
    %v328 = vmul.f32 %v327, 0.6931472
    %v329 = vlog2.pop %v285
    %v330 = vmul.f32 %v329, 0.6931472
    %v331 = vlog2.pop %v288
    %v332 = vmul.f32 %v331, 0.6931472
    %v333 = vlog2.pop %v291
    %v334 = vmul.f32 %v333, 0.6931472
    %v335 = vlog2.pop %v294
    %v336 = vmul.f32 %v335, 0.6931472
    %v337 = vlog2.pop %v297
    %v338 = vmul.f32 %v337, 0.6931472
    %v339 = vlog2.pop %v300
    %v340 = vmul.f32 %v339, 0.6931472
    %v341 = vlog2.pop %v303
    %v342 = vmul.f32 %v341, 0.6931472
    %v343 = vlog2.pop %v306
    %v344 = vmul.f32 %v343, 0.6931472
    %v345 = vlog2.pop %v309
    %v346 = vmul.f32 %v345, 0.6931472
    %v347 = vlog2.pop %v312
    %v348 = vmul.f32 %v347, 0.6931472
    %v349 = vlog2.pop %v315
    %v350 = vmul.f32 %v349, 0.6931472
    %v351 = vlog2.pop %v318
    %v352 = vmul.f32 %v351, 0.6931472
    %v353 = vlog2.pop %v321
    %v354 = vmul.f32 %v353, 0.6931472
    %v355 = vlog2.pop %v324
    %v356 = vmul.f32 %v355, 0.6931472
    %v357 = vadd.f32 %v119, %v326
    %v358 = vadd.f32 %v122, %v328
    %v359 = vadd.f32 %v125, %v330
    %v360 = vadd.f32 %v128, %v332
    %v361 = vadd.f32 %v131, %v334
    %v362 = vadd.f32 %v134, %v336
    %v363 = vadd.f32 %v137, %v338
    %v364 = vadd.f32 %v140, %v340
    %v365 = vadd.f32 %v143, %v342
    %v366 = vadd.f32 %v146, %v344
    %v367 = vadd.f32 %v149, %v346
    %v368 = vadd.f32 %v152, %v348
    %v369 = vadd.f32 %v155, %v350
    %v370 = vadd.f32 %v158, %v352
    %v371 = vadd.f32 %v161, %v354
    %v372 = vadd.f32 %v164, %v356
    %v373 = vsub.f32 %v357, %v183
    %v374 = vsub.f32 %v358, %v186
    %v375 = vsub.f32 %v359, %v189
    %v376 = vsub.f32 %v360, %v192
    %v377 = vsub.f32 %v361, %v195
    %v378 = vsub.f32 %v362, %v198
    %v379 = vsub.f32 %v363, %v201
    %v380 = vsub.f32 %v364, %v204
    %v381 = vsub.f32 %v365, %v207
    %v382 = vsub.f32 %v366, %v210
    %v383 = vsub.f32 %v367, %v213
    %v384 = vsub.f32 %v368, %v216
    %v385 = vsub.f32 %v369, %v219
    %v386 = vsub.f32 %v370, %v222
    %v387 = vsub.f32 %v371, %v225
    %v388 = vsub.f32 %v372, %v228
    %s389 = smul.u32 0, 128
    %v390 = vlaneseq
    %v391 = vshrl.u32 %v390, 7
    %v392 = vadd.s32 %v391, 8
    %v393 = vadd.s32 %v391, 16
    %v394 = vadd.s32 %v391, 24
    %v395 = vadd.s32 %v391, 32
    %v396 = vadd.s32 %v391, 40
    %v397 = vadd.s32 %v391, 48
    %v398 = vadd.s32 %v391, 56
    %v399 = vadd.s32 %v391, 64
    %v400 = vadd.s32 %v391, 72
    %v401 = vadd.s32 %v391, 80
    %v402 = vadd.s32 %v391, 88
    %v403 = vadd.s32 %v391, 96
    %v404 = vadd.s32 %v391, 104
    %v405 = vadd.s32 %v391, 112
    %v406 = vadd.s32 %v391, 120
    %v407 = vstv %s389
    %v408 = vadd.s32 %v407, %v391
    %v409 = vadd.s32 %v407, %v392
    %v410 = vadd.s32 %v407, %v393
    %v411 = vadd.s32 %v407, %v394
    %v412 = vadd.s32 %v407, %v395
    %v413 = vadd.s32 %v407, %v396
    %v414 = vadd.s32 %v407, %v397
    %v415 = vadd.s32 %v407, %v398
    %v416 = vadd.s32 %v407, %v399
    %v417 = vadd.s32 %v407, %v400
    %v418 = vadd.s32 %v407, %v401
    %v419 = vadd.s32 %v407, %v402
    %v420 = vadd.s32 %v407, %v403
    %v421 = vadd.s32 %v407, %v404
    %v422 = vadd.s32 %v407, %v405
    %v423 = vadd.s32 %v407, %v406
    %vm424 = vcmp.lt.s32.totalorder %v408, 16
    %vm425 = vcmp.lt.s32.totalorder %v409, 16
    %vm426 = vcmp.lt.s32.totalorder %v410, 16
    %vm427 = vcmp.lt.s32.totalorder %v411, 16
    %vm428 = vcmp.lt.s32.totalorder %v412, 16
    %vm429 = vcmp.lt.s32.totalorder %v413, 16
    %vm430 = vcmp.lt.s32.totalorder %v414, 16
    %vm431 = vcmp.lt.s32.totalorder %v415, 16
    %vm432 = vcmp.lt.s32.totalorder %v416, 16
    %vm433 = vcmp.lt.s32.totalorder %v417, 16
    %vm434 = vcmp.lt.s32.totalorder %v418, 16
    %vm435 = vcmp.lt.s32.totalorder %v419, 16
    %vm436 = vcmp.lt.s32.totalorder %v420, 16
    %vm437 = vcmp.lt.s32.totalorder %v421, 16
    %vm438 = vcmp.lt.s32.totalorder %v422, 16
    %vm439 = vcmp.lt.s32.totalorder %v423, 16
    %v440 = vsel %vm424, %v373, 0.0
    %v441 = vsel %vm425, %v374, 0.0
    %v442 = vsel %vm426, %v375, 0.0
    %v443 = vsel %vm427, %v376, 0.0
    %v444 = vsel %vm428, %v377, 0.0
    %v445 = vsel %vm429, %v378, 0.0
    %v446 = vsel %vm430, %v379, 0.0
    %v447 = vsel %vm431, %v380, 0.0
    %v448 = vsel %vm432, %v381, 0.0
    %v449 = vsel %vm433, %v382, 0.0
    %v450 = vsel %vm434, %v383, 0.0
    %v451 = vsel %vm435, %v384, 0.0
    %v452 = vsel %vm436, %v385, 0.0
    %v453 = vsel %vm437, %v386, 0.0
    %v454 = vsel %vm438, %v387, 0.0
    %v455 = vsel %vm439, %v388, 0.0
    %v456 = vld [vmem:[#allocation2] sm:$0x1]
    %vm457 = vcmask 7168
    %v458 = vsel %vm457, %v440, 0.0
    %v459 = vsel %vm457, %v441, 0.0
    %v460 = vadd.f32 %v458, %v459
    %v461 = vsel %vm457, %v442, 0.0
    %v462 = vadd.f32 %v460, %v461
    %v463 = vsel %vm457, %v443, 0.0
    %v464 = vadd.f32 %v462, %v463
    %v465 = vsel %vm457, %v444, 0.0
    %v466 = vadd.f32 %v464, %v465
    %v467 = vsel %vm457, %v445, 0.0
    %v468 = vadd.f32 %v466, %v467
    %v469 = vsel %vm457, %v446, 0.0
    %v470 = vadd.f32 %v468, %v469
    %v471 = vsel %vm457, %v447, 0.0
    %v472 = vadd.f32 %v470, %v471
    %v473 = vsel %vm457, %v448, 0.0
    %v474 = vadd.f32 %v472, %v473
    %v475 = vsel %vm457, %v449, 0.0
    %v476 = vadd.f32 %v474, %v475
    %v477 = vsel %vm457, %v450, 0.0
    %v478 = vadd.f32 %v476, %v477
    %v479 = vsel %vm457, %v451, 0.0
    %v480 = vadd.f32 %v478, %v479
    %v481 = vsel %vm457, %v452, 0.0
    %v482 = vadd.f32 %v480, %v481
    %v483 = vsel %vm457, %v453, 0.0
    %v484 = vadd.f32 %v482, %v483
    %v485 = vsel %vm457, %v454, 0.0
    %v486 = vadd.f32 %v484, %v485
    %v487 = vsel %vm457, %v455, 0.0
    %v488 = vadd.f32 %v486, %v487
    %489 = vadd.xlane.f32.xlu0 %v488
    %v490 = vpop.xlane.xlu0 %489
    %v491 = vrot.slane %v490, 4
    %v492 = vadd.f32 %v490, %v491
    %v493 = vrot.slane %v492, 2
    %v494 = vadd.f32 %v492, %v493
    %v495 = vrot.slane %v494, 1
    %v496 = vadd.f32 %v494, %v495
    %s497 = vtos %v496
    %v498 = vstv %s497
    %v499 = vadd.f32 %v456, %v498
    %vm500 = vcmask 0
    %501 = vst.msk [vmem:[#allocation2] sm:$0x1] %vm500, %v499
    // Predicated region
    $region14: #{tpu_custom_call.1} parent=1 // pred_check
      _
    $region15: #{tpu_custom_call.1} parent=1 // pred_check_branch
      %503 = sbr.rel (0) target = $region17
    $region16: #{tpu_custom_call.1} parent=1 // pred_region
      %s505 = ssub.s32 16, 16
      %506 = vsyncadd [#allocation3], %s505
      %s508 = sshll.u32 [#allocation2], 4
      %s509 = int_to_ptr.vmem [resolvable:$true] %s508
      %511 = dma.vmem_to_hbm [thread:$0]  %s509, 16, %s2, [#allocation3]
    $region17: #{tpu_custom_call.1} parent=1 // pred_fallthru
      _
    // Predicated region
    $region18: #{tpu_custom_call.1} parent=1 // pred_check
      _
    $region19: #{tpu_custom_call.1} parent=1 // pred_check_branch
      %513 = sbr.rel (0) target = $region21
    $region20: #{tpu_custom_call.1} parent=1 // pred_region
      %514 = dma.done [#allocation3], 16
    $region21: #{tpu_custom_call.1} parent=1 // pred_fallthru
      _
    %515 = vsyncpa [#allocation3], 1

</llo_original>
